<compile_context>
chip_gen: v5e
topology: v5e:2x2
jax: 0.10.0
libtpu: 0.0.40
codegen_flags: <defaults>
</compile_context>

<pallas_src>
import functools

import jax
import jax.numpy as jnp
from jax import lax
from jax.experimental import pallas as pl
from jax.experimental.pallas import tpu as pltpu


def _round_up(x, m):
    return (x + m - 1) // m * m


def _device_kind():
    try:
        return jax.devices()[0].device_kind.lower()
    except Exception:
        return ""


def select_act_dtype():
    """bf16 elementwise (LeakyReLU) only pays off on chips with bf16 VPUs."""
    kind = _device_kind()
    return jnp.bfloat16 if ("v6" in kind or "v7" in kind) else jnp.float32


def _discriminator_kernel(x_ref,
                          w1_ref, b1_ref,
                          w2_ref, b2_ref,
                          w3_ref, b3_ref,
                          w4_ref, b4_ref,
                          o_ref,
                          *, act_dtype):
    """One batch tile.

    x_ref: (TILE_B, emb) float input in natural layout (cast to bf16 here).
    w{1,2,3}: (out_features, in_features) bf16 [PyTorch layout], biases (out, 1) f32.
    w4 is a (conv_dim, 1) f32 column applied as multiply + sublane reduction.
    o_ref: (1, TILE_B) f32 -- batch on lanes (lane-dense stores).
    """
    nt = (((1,), (1,)), ((), ()))                 # contract last dims: A @ B^T

    x = x_ref[...].astype(jnp.bfloat16)           # (tb, emb) bf16

    # fc1: (conv8, emb) x (tb, emb)^T -> (conv8, tb); batch lands on lanes.
    h = lax.dot_general(w1_ref[...], x, nt,
                        preferred_element_type=jnp.float32) + b1_ref[...]
    h = h.astype(act_dtype)
    h = jnp.maximum(h, 0.2 * h)                   # LeakyReLU(0.2)

    h = jnp.dot(w2_ref[...], h.astype(jnp.bfloat16),
                preferred_element_type=jnp.float32) + b2_ref[...]
    h = h.astype(act_dtype)
    h = jnp.maximum(h, 0.2 * h)

    h = jnp.dot(w3_ref[...], h.astype(jnp.bfloat16),
                preferred_element_type=jnp.float32) + b3_ref[...]
    h = h.astype(act_dtype)
    h = jnp.maximum(h, 0.2 * h)                   # (conv_dim, tb)

    # fc4 (conv_dim -> 1): elementwise mul + sublane reduce (VPU/XLU), no MXU pass.
    logits = jnp.sum(h.astype(jnp.float32) * w4_ref[...], axis=0,
                     keepdims=True) + b4_ref[...]                 # (1, tb) f32
    logits = jnp.clip(logits, -30.0, 30.0)        # avoid inf in exp for huge logits
    prob = pl.reciprocal(1.0 + jnp.exp(-logits), approx=True)     # EUP sigmoid
    o_ref[...] = prob.astype(o_ref.dtype)


def discriminator_forward(x, params, tile_b=2048, act_dtype=None):
    """x: (B, embedding_size) float; returns (B, 1) float32 probabilities."""
    B, emb = x.shape
    kind = _device_kind()
    if act_dtype is None:
        act_dtype = select_act_dtype()

    # Tile selection: lane-dense (multiple of 128), large enough to amortize
    # per-grid-step overhead, and at least two roughly balanced blocks whenever
    # the batch allows so v7x's two TensorCores both get work.
    padded_b = _round_up(B, 128)
    tb = max(128, min(_round_up(tile_b, 128),
                      _round_up(pl.cdiv(padded_b, 2), 128)))
    if B < tb:
        # Tiny batches: pad rows up to one lane-dense tile (negligible copy).
        x = jnp.pad(x, ((0, tb - B), (0, 0)))
    num_blocks = pl.cdiv(B, tb)
    out_w = num_blocks * tb          # output padded to whole tiles; sliced below

    w1, b1 = params["w1"], params["b1"]
    w2, b2 = params["w2"], params["b2"]
    w3, b3 = params["w3"], params["b3"]
    w4_col = params["w4"].astype(jnp.float32).T    # (conv_dim, 1)
    b4 = params["b4"]

    def resident(arr):
        return pl.BlockSpec(arr.shape, lambda i: (0, 0))   # DMA'd once, VMEM-resident

    # v5e: tiny per-step DMAs are issue-latency bound -> 3-deep input pipelining.
    x_spec_kwargs = {}
    if "v5e" in kind or "v5 lite" in kind:
        x_spec_kwargs["pipeline_mode"] = pl.Buffered(3)
    x_spec = pl.BlockSpec((tb, emb), lambda i: (i, 0), **x_spec_kwargs)

    kernel = functools.partial(_discriminator_kernel, act_dtype=act_dtype)

    out_row = pl.pallas_call(
        kernel,
        out_shape=jax.ShapeDtypeStruct((1, out_w), jnp.float32),
        grid=(num_blocks,),
        in_specs=[
            x_spec,                                  # pipelined natural-layout x tiles
            resident(w1), resident(b1),
            resident(w2), resident(b2),
            resident(w3), resident(b3),
            resident(w4_col), resident(b4),
        ],
        out_specs=pl.BlockSpec((1, tb), lambda i: (0, i)),   # lane-dense output slab
        compiler_params=pltpu.CompilerParams(
            dimension_semantics=("parallel",)),              # megacore split on v7x
    )(x, w1, b1, w2, b2, w3, b3, w4_col, b4)

    return out_row[0, :B].reshape(B, 1)


def init_params(key, embedding_size, conv_dim):
    """nn.Linear-style init U(-1/sqrt(fan_in), 1/sqrt(fan_in)).

    Weights kept in PyTorch (out_features, in_features) layout; fc1-fc3 in bf16
    (MXU inputs), fc4 + all biases in f32.  Biases are (out_features, 1) columns.
    """
    dims = [embedding_size, conv_dim * 8, conv_dim * 4, conv_dim, 1]
    params = {}
    for i in range(4):
        fan_in, fan_out = dims[i], dims[i + 1]
        key, kw, kb = jax.random.split(key, 3)
        bound = 1.0 / jnp.sqrt(fan_in)
        w = jax.random.uniform(kw, (fan_out, fan_in), jnp.float32, -bound, bound)
        b = jax.random.uniform(kb, (fan_out, 1), jnp.float32, -bound, bound)
        params[f"w{i + 1}"] = w.astype(jnp.bfloat16 if i < 3 else jnp.float32)
        params[f"b{i + 1}"] = b
    return params


def reference_forward(x, params, act_dtype=jnp.float32):
    """Pure-JAX reference mirroring the kernel's dtype path (bf16 matmul, f32 acc)."""
    h = x.astype(jnp.float32)
    for i in (1, 2, 3):
        w, b = params[f"w{i}"], params[f"b{i}"]
        h = jnp.dot(h.astype(jnp.bfloat16), w.T.astype(jnp.bfloat16),
                    preferred_element_type=jnp.float32) + b.T
        h = h.astype(act_dtype)
        h = jnp.maximum(h, 0.2 * h).astype(jnp.float32)
    logits = jnp.dot(h, params["w4"].astype(jnp.float32).T) + params["b4"].T
    return jax.nn.sigmoid(logits)


if __name__ == "__main__":
    key = jax.random.PRNGKey(0)
    embedding_size = 32
    conv_dim = 16
    act_dtype = select_act_dtype()

    key, kp = jax.random.split(key)
    params = init_params(kp, embedding_size, conv_dim)

    # Small single-tile case (exercises the tiny-batch row-pad path).
    key, kx = jax.random.split(key)
    x_small = jax.random.normal(kx, (8, embedding_size), jnp.float32)
    out_small = jax.block_until_ready(discriminator_forward(x_small, params))
    ref_small = reference_forward(x_small, params, act_dtype)
    assert out_small.shape == (8, 1)
    assert jnp.allclose(out_small, ref_small, atol=5e-3, rtol=5e-3)

    # Multi-tile case: exercises the batch grid (2 balanced blocks), resident
    # weights, and Pallas ragged last-block handling (no wrapper-side pad).
    key, kx = jax.random.split(key)
    x_big = jax.random.normal(kx, (600, embedding_size), jnp.float32)
    out_big = jax.block_until_ready(discriminator_forward(x_big, params))
    ref_big = reference_forward(x_big, params, act_dtype)
    assert out_big.shape == (600, 1)
    assert jnp.allclose(out_big, ref_big, atol=5e-3, rtol=5e-3)

    print("KERNEL_OK")
</pallas_src>

<mosaic_0001>
module attributes {stable_mosaic.version = 11 : i64} {
  func.func @_discriminator_kernel(%arg0: i32, %arg1: memref<128x32xf32, #tpu.memory_space<vmem>>, %arg2: memref<128x32xbf16, #tpu.memory_space<vmem>>, %arg3: memref<128x1xf32, #tpu.memory_space<vmem>>, %arg4: memref<64x128xbf16, #tpu.memory_space<vmem>>, %arg5: memref<64x1xf32, #tpu.memory_space<vmem>>, %arg6: memref<16x64xbf16, #tpu.memory_space<vmem>>, %arg7: memref<16x1xf32, #tpu.memory_space<vmem>>, %arg8: memref<16x1xf32, #tpu.memory_space<vmem>>, %arg9: memref<1x1xf32, #tpu.memory_space<vmem>>, %arg10: memref<1x128xf32, #tpu.memory_space<vmem>>) attributes {dimension_semantics = [#tpu.dimension_semantics<parallel>], iteration_bounds = array<i64: 1>, scalar_prefetch = 0 : i64, scratch_operands = 0 : i64, tpu.core_type = #tpu.core_type<tc>, window_params = [{transform_indices = @transform_0, window_bounds = array<i64: 128, 32>}, {pipeline_mode = #tpu.pipeline_mode<synchronous>, transform_indices = @transform_1, window_bounds = array<i64: 128, 32>}, {pipeline_mode = #tpu.pipeline_mode<synchronous>, transform_indices = @transform_2, window_bounds = array<i64: 128, 1>}, {pipeline_mode = #tpu.pipeline_mode<synchronous>, transform_indices = @transform_3, window_bounds = array<i64: 64, 128>}, {pipeline_mode = #tpu.pipeline_mode<synchronous>, transform_indices = @transform_4, window_bounds = array<i64: 64, 1>}, {pipeline_mode = #tpu.pipeline_mode<synchronous>, transform_indices = @transform_5, window_bounds = array<i64: 16, 64>}, {pipeline_mode = #tpu.pipeline_mode<synchronous>, transform_indices = @transform_6, window_bounds = array<i64: 16, 1>}, {pipeline_mode = #tpu.pipeline_mode<synchronous>, transform_indices = @transform_7, window_bounds = array<i64: 16, 1>}, {pipeline_mode = #tpu.pipeline_mode<synchronous>, transform_indices = @transform_8, window_bounds = array<i64: 1, 1>}, {transform_indices = @transform_9, window_bounds = array<i64: 1, 128>}]} {
    %c0 = arith.constant 0 : index
    %c0_0 = arith.constant 0 : index
    %0 = vector.load %arg1[%c0, %c0_0] : memref<128x32xf32, #tpu.memory_space<vmem>>, vector<128x32xf32>
    %1 = arith.truncf %0 : vector<128x32xf32> to vector<128x32xbf16>
    %c0_1 = arith.constant 0 : index
    %c0_2 = arith.constant 0 : index
    %2 = vector.load %arg2[%c0_1, %c0_2] : memref<128x32xbf16, #tpu.memory_space<vmem>>, vector<128x32xbf16>
    %cst = arith.constant dense<0.000000e+00> : vector<128x128xf32>
    %3 = tpu.matmul %2, %1, %cst {dimension_numbers = #tpu.dot_dimension_numbers<[1], [1], [0], [0], [0, 0, 1, 0], [], []>} : vector<128x32xbf16>, vector<128x32xbf16>, vector<128x128xf32> -> vector<128x128xf32>
    %c0_3 = arith.constant 0 : index
    %c0_4 = arith.constant 0 : index
    %4 = vector.load %arg3[%c0_3, %c0_4] : memref<128x1xf32, #tpu.memory_space<vmem>>, vector<128x1xf32>
    %5 = vector.broadcast %4 : vector<128x1xf32> to vector<128x128xf32>
    %6 = arith.addf %3, %5 : vector<128x128xf32>
    %cst_5 = arith.constant 2.000000e-01 : f32
    %7 = vector.broadcast %cst_5 : f32 to vector<128x128xf32>
    %8 = arith.mulf %7, %6 : vector<128x128xf32>
    %9 = arith.maximumf %6, %8 : vector<128x128xf32>
    %c0_6 = arith.constant 0 : index
    %c0_7 = arith.constant 0 : index
    %10 = vector.load %arg4[%c0_6, %c0_7] : memref<64x128xbf16, #tpu.memory_space<vmem>>, vector<64x128xbf16>
    %11 = arith.truncf %9 : vector<128x128xf32> to vector<128x128xbf16>
    %cst_8 = arith.constant dense<0.000000e+00> : vector<64x128xf32>
    %12 = tpu.matmul %10, %11, %cst_8 {dimension_numbers = #tpu.dot_dimension_numbers<[1], [0], [0], [1], [0, 0, 1, 1], [], []>} : vector<64x128xbf16>, vector<128x128xbf16>, vector<64x128xf32> -> vector<64x128xf32>
    %c0_9 = arith.constant 0 : index
    %c0_10 = arith.constant 0 : index
    %13 = vector.load %arg5[%c0_9, %c0_10] : memref<64x1xf32, #tpu.memory_space<vmem>>, vector<64x1xf32>
    %14 = vector.broadcast %13 : vector<64x1xf32> to vector<64x128xf32>
    %15 = arith.addf %12, %14 : vector<64x128xf32>
    %cst_11 = arith.constant 2.000000e-01 : f32
    %16 = vector.broadcast %cst_11 : f32 to vector<64x128xf32>
    %17 = arith.mulf %16, %15 : vector<64x128xf32>
    %18 = arith.maximumf %15, %17 : vector<64x128xf32>
    %c0_12 = arith.constant 0 : index
    %c0_13 = arith.constant 0 : index
    %19 = vector.load %arg6[%c0_12, %c0_13] : memref<16x64xbf16, #tpu.memory_space<vmem>>, vector<16x64xbf16>
    %20 = arith.truncf %18 : vector<64x128xf32> to vector<64x128xbf16>
    %cst_14 = arith.constant dense<0.000000e+00> : vector<16x128xf32>
    %21 = tpu.matmul %19, %20, %cst_14 {dimension_numbers = #tpu.dot_dimension_numbers<[1], [0], [0], [1], [0, 0, 1, 1], [], []>} : vector<16x64xbf16>, vector<64x128xbf16>, vector<16x128xf32> -> vector<16x128xf32>
    %c0_15 = arith.constant 0 : index
    %c0_16 = arith.constant 0 : index
    %22 = vector.load %arg7[%c0_15, %c0_16] : memref<16x1xf32, #tpu.memory_space<vmem>>, vector<16x1xf32>
    %23 = vector.broadcast %22 : vector<16x1xf32> to vector<16x128xf32>
    %24 = arith.addf %21, %23 : vector<16x128xf32>
    %cst_17 = arith.constant 2.000000e-01 : f32
    %25 = vector.broadcast %cst_17 : f32 to vector<16x128xf32>
    %26 = arith.mulf %25, %24 : vector<16x128xf32>
    %27 = arith.maximumf %24, %26 : vector<16x128xf32>
    %c0_18 = arith.constant 0 : index
    %c0_19 = arith.constant 0 : index
    %28 = vector.load %arg8[%c0_18, %c0_19] : memref<16x1xf32, #tpu.memory_space<vmem>>, vector<16x1xf32>
    %29 = vector.broadcast %28 : vector<16x1xf32> to vector<16x128xf32>
    %30 = arith.mulf %27, %29 : vector<16x128xf32>
    %cst_20 = arith.constant dense<0.000000e+00> : vector<128xf32>
    %31 = vector.multi_reduction <add>, %30, %cst_20 [0] : vector<16x128xf32> to vector<128xf32>
    %32 = vector.shape_cast %31 : vector<128xf32> to vector<1x128xf32>
    %c0_21 = arith.constant 0 : index
    %c0_22 = arith.constant 0 : index
    %33 = vector.load %arg9[%c0_21, %c0_22] : memref<1x1xf32, #tpu.memory_space<vmem>>, vector<1x1xf32>
    %34 = vector.broadcast %33 : vector<1x1xf32> to vector<1x128xf32>
    %35 = arith.addf %32, %34 : vector<1x128xf32>
    %cst_23 = arith.constant -3.000000e+01 : f32
    %cst_24 = arith.constant 3.000000e+01 : f32
    %36 = vector.broadcast %cst_23 : f32 to vector<1x128xf32>
    %37 = arith.maximumf %36, %35 : vector<1x128xf32>
    %38 = vector.broadcast %cst_24 : f32 to vector<1x128xf32>
    %39 = arith.minimumf %38, %37 : vector<1x128xf32>
    %cst_25 = arith.constant 0.000000e+00 : f32
    %40 = vector.broadcast %cst_25 : f32 to vector<1x128xf32>
    %41 = arith.subf %40, %39 : vector<1x128xf32>
    %42 = math.exp %41 : vector<1x128xf32>
    %cst_26 = arith.constant 1.000000e+00 : f32
    %43 = vector.broadcast %cst_26 : f32 to vector<1x128xf32>
    %44 = arith.addf %43, %42 : vector<1x128xf32>
    %45 = tpu.reciprocal %44 {approx = true} : vector<1x128xf32> -> vector<1x128xf32>
    %c0_27 = arith.constant 0 : index
    %c0_28 = arith.constant 0 : index
    %46 = vector.load %arg10[%c0_27, %c0_28] : memref<1x128xf32, #tpu.memory_space<vmem>>, vector<1x128xf32>
    tpu.vector_store %arg10[%c0_27, %c0_28], %45 {strides = array<i32>} : memref<1x128xf32, #tpu.memory_space<vmem>>, vector<1x128xf32>,
    return
  }
  func.func @transform_0(%arg0: i32) -> (i32, i32) {
    %c0_i32 = arith.constant 0 : i32
    %c0_i32_0 = arith.constant 0 : i32
    return %arg0, %c0_i32 : i32, i32
  }
  func.func @transform_1(%arg0: i32) -> (i32, i32) {
    %c0_i32 = arith.constant 0 : i32
    %c0_i32_0 = arith.constant 0 : i32
    %c0_i32_1 = arith.constant 0 : i32
    return %c0_i32, %c0_i32_0 : i32, i32
  }
  func.func @transform_2(%arg0: i32) -> (i32, i32) {
    %c0_i32 = arith.constant 0 : i32
    %c0_i32_0 = arith.constant 0 : i32
    %c0_i32_1 = arith.constant 0 : i32
    return %c0_i32, %c0_i32_0 : i32, i32
  }
  func.func @transform_3(%arg0: i32) -> (i32, i32) {
    %c0_i32 = arith.constant 0 : i32
    %c0_i32_0 = arith.constant 0 : i32
    %c0_i32_1 = arith.constant 0 : i32
    return %c0_i32, %c0_i32_0 : i32, i32
  }
  func.func @transform_4(%arg0: i32) -> (i32, i32) {
    %c0_i32 = arith.constant 0 : i32
    %c0_i32_0 = arith.constant 0 : i32
    %c0_i32_1 = arith.constant 0 : i32
    return %c0_i32, %c0_i32_0 : i32, i32
  }
  func.func @transform_5(%arg0: i32) -> (i32, i32) {
    %c0_i32 = arith.constant 0 : i32
    %c0_i32_0 = arith.constant 0 : i32
    %c0_i32_1 = arith.constant 0 : i32
    return %c0_i32, %c0_i32_0 : i32, i32
  }
  func.func @transform_6(%arg0: i32) -> (i32, i32) {
    %c0_i32 = arith.constant 0 : i32
    %c0_i32_0 = arith.constant 0 : i32
    %c0_i32_1 = arith.constant 0 : i32
    return %c0_i32, %c0_i32_0 : i32, i32
  }
  func.func @transform_7(%arg0: i32) -> (i32, i32) {
    %c0_i32 = arith.constant 0 : i32
    %c0_i32_0 = arith.constant 0 : i32
    %c0_i32_1 = arith.constant 0 : i32
    return %c0_i32, %c0_i32_0 : i32, i32
  }
  func.func @transform_8(%arg0: i32) -> (i32, i32) {
    %c0_i32 = arith.constant 0 : i32
    %c0_i32_0 = arith.constant 0 : i32
    %c0_i32_1 = arith.constant 0 : i32
    return %c0_i32, %c0_i32_0 : i32, i32
  }
  func.func @transform_9(%arg0: i32) -> (i32, i32) {
    %c0_i32 = arith.constant 0 : i32
    %c0_i32_0 = arith.constant 0 : i32
    return %c0_i32, %arg0 : i32, i32
  }
}

</mosaic_0001>

<llo_original>
// kernel: tpu_custom_call.1
$region0: #{tpu_custom_call.1}
  #allocation0 [shape = 'u32[]', space=smem, size = 0x4, offset = 0x4, fixed_abs, tag = 'smem constant byte address 0x4 - core index']
  #allocation1 [shape = 'u32[72,128]{1,0:T(1,128)}', space=vmem, size = 0x9000, scoped, tag = 'internal scratch']
  #allocation2 [shape = 'f32[1,1]{1,0:T(1,128)S(1)}', space=vmem, size = 0x200, scoped, tag = 'scoped memory for tpu_custom_call.1']
  %s0 = inlined_call_operand.vmem [shape: f32[128,32], index: 0, kind: input, shape index: {}]
  %s1 = inlined_call_operand.vmem [shape: bf16[128,32], index: 1, kind: input, shape index: {}]
  %s2 = inlined_call_operand.vmem [shape: f32[128,1], index: 2, kind: input, shape index: {}]
  %s3 = inlined_call_operand.vmem [shape: bf16[64,128], index: 3, kind: input, shape index: {}]
  %s4 = inlined_call_operand.vmem [shape: f32[64,1], index: 4, kind: input, shape index: {}]
  %s5 = inlined_call_operand.vmem [shape: bf16[16,64], index: 5, kind: input, shape index: {}]
  %s6 = inlined_call_operand.vmem [shape: f32[16,1], index: 6, kind: input, shape index: {}]
  %s7 = inlined_call_operand.vmem [shape: f32[16,1], index: 7, kind: input, shape index: {}]
  %s8 = inlined_call_operand.<no memory space> [shape: f32[1,1], index: 8, kind: input, shape index: {}]
  %s9 = inlined_call_operand.hbm [shape: f32[1,128], index: 9, kind: output, shape index: {}]
  %s10 = sld [smem:[#allocation0]]
  $region46: #{tpu_custom_call.1} parent=0
    _
  %s12 = ssub.s32 1, %s10
  %s13 = scalar_select 0, %s12, %s10
  %v14 = vstv %s8
  %15 = vst [vmem:[#allocation2] sm:$0x1] %v14
  $region1: #{tpu_custom_call.1} parent=0
    #allocation3 [shape = 'u8[512]{0}', space=vmem, size = 0x400, scoped, tag = 'output window, operand 0, single buffered']
    #allocation4 [shape = 's32[1]{0}', space=sflag, size = 0x4, scoped, tag = 'scoped memory for tpu_custom_call.1']
    %16 = vsyncpa [#allocation4], 0
    // Predicated region
    $region2: #{tpu_custom_call.1} parent=1 // pred_check
      _
    $region3: #{tpu_custom_call.1} parent=1 // pred_check_branch
      %18 = sbr.rel (0) target = $region5
    $region4: #{tpu_custom_call.1} parent=1 // pred_region
      _
    $region5: #{tpu_custom_call.1} parent=1 // pred_fallthru
      _
    // Predicated region
    $region6: #{tpu_custom_call.1} parent=1 // pred_check
      _
    $region7: #{tpu_custom_call.1} parent=1 // pred_check_branch
      %20 = sbr.rel (0) target = $region9
    $region8: #{tpu_custom_call.1} parent=1 // pred_region
      _
    $region9: #{tpu_custom_call.1} parent=1 // pred_fallthru
      _
    // Predicated region
    $region10: #{tpu_custom_call.1} parent=1 // pred_check
      _
    $region11: #{tpu_custom_call.1} parent=1 // pred_check_branch
      %22 = sbr.rel (0) target = $region13
    $region12: #{tpu_custom_call.1} parent=1 // pred_region
      _
    $region13: #{tpu_custom_call.1} parent=1 // pred_fallthru
      _
    // Predicated region
    $region14: #{tpu_custom_call.1} parent=1 // pred_check
      _
    $region15: #{tpu_custom_call.1} parent=1 // pred_check_branch
      %24 = sbr.rel (0) target = $region17
    $region16: #{tpu_custom_call.1} parent=1 // pred_region
      _
    $region17: #{tpu_custom_call.1} parent=1 // pred_fallthru
      _
    // Predicated region
    $region18: #{tpu_custom_call.1} parent=1 // pred_check
      _
    $region19: #{tpu_custom_call.1} parent=1 // pred_check_branch
      %26 = sbr.rel (0) target = $region21
    $region20: #{tpu_custom_call.1} parent=1 // pred_region
      _
    $region21: #{tpu_custom_call.1} parent=1 // pred_fallthru
      _
    // Predicated region
    $region22: #{tpu_custom_call.1} parent=1 // pred_check
      _
    $region23: #{tpu_custom_call.1} parent=1 // pred_check_branch
      %28 = sbr.rel (0) target = $region25
    $region24: #{tpu_custom_call.1} parent=1 // pred_region
      _
    $region25: #{tpu_custom_call.1} parent=1 // pred_fallthru
      _
    // Predicated region
    $region26: #{tpu_custom_call.1} parent=1 // pred_check
      _
    $region27: #{tpu_custom_call.1} parent=1 // pred_check_branch
      %30 = sbr.rel (0) target = $region29
    $region28: #{tpu_custom_call.1} parent=1 // pred_region
      _
    $region29: #{tpu_custom_call.1} parent=1 // pred_fallthru
      _
    // Predicated region
    $region30: #{tpu_custom_call.1} parent=1 // pred_check
      _
    $region31: #{tpu_custom_call.1} parent=1 // pred_check_branch
      %32 = sbr.rel (0) target = $region33
    $region32: #{tpu_custom_call.1} parent=1 // pred_region
      _
    $region33: #{tpu_custom_call.1} parent=1 // pred_fallthru
      _
    // Predicated region
    $region34: #{tpu_custom_call.1} parent=1 // pred_check
      _
    $region35: #{tpu_custom_call.1} parent=1 // pred_check_branch
      %34 = sbr.rel (0) target = $region37
    $region36: #{tpu_custom_call.1} parent=1 // pred_region
      _
    $region37: #{tpu_custom_call.1} parent=1 // pred_fallthru
      _
    %v36 = vld [vmem:[%s0] sm:$0xff]
    %v37 = vld [vmem:[%s0 + $0x8] sm:$0xff]
    %v38 = vld [vmem:[%s0 + $0x10] sm:$0xff]
    %v39 = vld [vmem:[%s0 + $0x18] sm:$0xff]
    %v40 = vld [vmem:[%s0 + $0x20] sm:$0xff]
    %v41 = vld [vmem:[%s0 + $0x28] sm:$0xff]
    %v42 = vld [vmem:[%s0 + $0x30] sm:$0xff]
    %v43 = vld [vmem:[%s0 + $0x38] sm:$0xff]
    %v44 = vld [vmem:[%s0 + $0x40] sm:$0xff]
    %v45 = vld [vmem:[%s0 + $0x48] sm:$0xff]
    %v46 = vld [vmem:[%s0 + $0x50] sm:$0xff]
    %v47 = vld [vmem:[%s0 + $0x58] sm:$0xff]
    %v48 = vld [vmem:[%s0 + $0x60] sm:$0xff]
    %v49 = vld [vmem:[%s0 + $0x68] sm:$0xff]
    %v50 = vld [vmem:[%s0 + $0x70] sm:$0xff]
    %v51 = vld [vmem:[%s0 + $0x78] sm:$0xff]
    %v52 = vpack.c.bf16 %v37, %v36
    %v53 = vpack.c.bf16 %v39, %v38
    %v54 = vpack.c.bf16 %v41, %v40
    %v55 = vpack.c.bf16 %v43, %v42
    %v56 = vpack.c.bf16 %v45, %v44
    %v57 = vpack.c.bf16 %v47, %v46
    %v58 = vpack.c.bf16 %v49, %v48
    %v59 = vpack.c.bf16 %v51, %v50
    %v60 = vld [vmem:[%s1] sm:$0xf]
    %v61 = vld [vmem:[%s1 + $0x4] sm:$0xf]
    %v62 = vld [vmem:[%s1 + $0x8] sm:$0xf]
    %v63 = vld [vmem:[%s1 + $0xc] sm:$0xf]
    %v64 = vld [vmem:[%s1 + $0x10] sm:$0xf]
    %v65 = vld [vmem:[%s1 + $0x14] sm:$0xf]
    %v66 = vld [vmem:[%s1 + $0x18] sm:$0xf]
    %v67 = vld [vmem:[%s1 + $0x1c] sm:$0xf]
    %v68 = vld [vmem:[%s1 + $0x20] sm:$0xf]
    %v69 = vld [vmem:[%s1 + $0x24] sm:$0xf]
    %v70 = vld [vmem:[%s1 + $0x28] sm:$0xf]
    %v71 = vld [vmem:[%s1 + $0x2c] sm:$0xf]
    %v72 = vld [vmem:[%s1 + $0x30] sm:$0xf]
    %v73 = vld [vmem:[%s1 + $0x34] sm:$0xf]
    %v74 = vld [vmem:[%s1 + $0x38] sm:$0xf]
    %v75 = vld [vmem:[%s1 + $0x3c] sm:$0xf]
    %v76 = vld [vmem:[%s2] sm:$0xff]
    %v77 = vld [vmem:[%s2 + $0x8] sm:$0xff]
    %v78 = vld [vmem:[%s2 + $0x10] sm:$0xff]
    %v79 = vld [vmem:[%s2 + $0x18] sm:$0xff]
    %v80 = vld [vmem:[%s2 + $0x20] sm:$0xff]
    %v81 = vld [vmem:[%s2 + $0x28] sm:$0xff]
    %v82 = vld [vmem:[%s2 + $0x30] sm:$0xff]
    %v83 = vld [vmem:[%s2 + $0x38] sm:$0xff]
    %v84 = vld [vmem:[%s2 + $0x40] sm:$0xff]
    %v85 = vld [vmem:[%s2 + $0x48] sm:$0xff]
    %v86 = vld [vmem:[%s2 + $0x50] sm:$0xff]
    %v87 = vld [vmem:[%s2 + $0x58] sm:$0xff]
    %v88 = vld [vmem:[%s2 + $0x60] sm:$0xff]
    %v89 = vld [vmem:[%s2 + $0x68] sm:$0xff]
    %v90 = vld [vmem:[%s2 + $0x70] sm:$0xff]
    %v91 = vld [vmem:[%s2 + $0x78] sm:$0xff]
    %93 = vset.pattern.permute.xlu0 0
    %94 = vperm.xlu0 %93, %v76
    %v95 = vpop.permute.xlu0 %94
    %98 = vset.pattern.permute.xlu0 0
    %99 = vperm.xlu0 %98, %v77
    %v100 = vpop.permute.xlu0 %99
    %103 = vset.pattern.permute.xlu0 0
    %104 = vperm.xlu0 %103, %v78
    %v105 = vpop.permute.xlu0 %104
    %108 = vset.pattern.permute.xlu0 0
    %109 = vperm.xlu0 %108, %v79
    %v110 = vpop.permute.xlu0 %109
    %113 = vset.pattern.permute.xlu0 0
    %114 = vperm.xlu0 %113, %v80
    %v115 = vpop.permute.xlu0 %114
    %118 = vset.pattern.permute.xlu0 0
    %119 = vperm.xlu0 %118, %v81
    %v120 = vpop.permute.xlu0 %119
    %123 = vset.pattern.permute.xlu0 0
    %124 = vperm.xlu0 %123, %v82
    %v125 = vpop.permute.xlu0 %124
    %128 = vset.pattern.permute.xlu0 0
    %129 = vperm.xlu0 %128, %v83
    %v130 = vpop.permute.xlu0 %129
    %133 = vset.pattern.permute.xlu0 0
    %134 = vperm.xlu0 %133, %v84
    %v135 = vpop.permute.xlu0 %134
    %138 = vset.pattern.permute.xlu0 0
    %139 = vperm.xlu0 %138, %v85
    %v140 = vpop.permute.xlu0 %139
    %143 = vset.pattern.permute.xlu0 0
    %144 = vperm.xlu0 %143, %v86
    %v145 = vpop.permute.xlu0 %144
    %148 = vset.pattern.permute.xlu0 0
    %149 = vperm.xlu0 %148, %v87
    %v150 = vpop.permute.xlu0 %149
    %153 = vset.pattern.permute.xlu0 0
    %154 = vperm.xlu0 %153, %v88
    %v155 = vpop.permute.xlu0 %154
    %158 = vset.pattern.permute.xlu0 0
    %159 = vperm.xlu0 %158, %v89
    %v160 = vpop.permute.xlu0 %159
    %163 = vset.pattern.permute.xlu0 0
    %164 = vperm.xlu0 %163, %v90
    %v165 = vpop.permute.xlu0 %164
    %168 = vset.pattern.permute.xlu0 0
    %169 = vperm.xlu0 %168, %v91
    %v170 = vpop.permute.xlu0 %169
    %v188 = vunpack.c.l.b16 %v60
    %v189 = vunpack.c.l.b16 %v61
    %v190 = vunpack.c.l.b16 %v62
    %v191 = vunpack.c.l.b16 %v63
    %v192 = vunpack.c.l.b16 %v64
    %v193 = vunpack.c.l.b16 %v65
    %v194 = vunpack.c.l.b16 %v66
    %v195 = vunpack.c.l.b16 %v67
    %v196 = vunpack.c.l.b16 %v68
    %v197 = vunpack.c.l.b16 %v69
    %v198 = vunpack.c.l.b16 %v70
    %v199 = vunpack.c.l.b16 %v71
    %v200 = vunpack.c.l.b16 %v72
    %v201 = vunpack.c.l.b16 %v73
    %v202 = vunpack.c.l.b16 %v74
    %v203 = vunpack.c.l.b16 %v75
    %v204 = vpack.c.b16 %v189, %v188
    %v205 = vpack.c.b16 %v191, %v190
    %v206 = vpack.c.b16 %v193, %v192
    %v207 = vpack.c.b16 %v195, %v194
    %v208 = vpack.c.b16 %v197, %v196
    %v209 = vpack.c.b16 %v199, %v198
    %v210 = vpack.c.b16 %v201, %v200
    %v211 = vpack.c.b16 %v203, %v202
    %vm212 = vcmask 261120
    %v214 = vsel %vm212, %v204, 0
    %v217 = vsel %vm212, %v205, 0
    %v220 = vsel %vm212, %v206, 0
    %v223 = vsel %vm212, %v207, 0
    %v226 = vsel %vm212, %v208, 0
    %v229 = vsel %vm212, %v209, 0
    %v232 = vsel %vm212, %v210, 0
    %v235 = vsel %vm212, %v211, 0
    %v238 = vsel %vm212, %v52, 0
    %v241 = vsel %vm212, %v53, 0
    %v244 = vsel %vm212, %v54, 0
    %v247 = vsel %vm212, %v55, 0
    %v250 = vsel %vm212, %v56, 0
    %v253 = vsel %vm212, %v57, 0
    %v256 = vsel %vm212, %v58, 0
    %v259 = vsel %vm212, %v59, 0
    %261 = vmatpush.bf16.xpose.msra.mxu0 %v259
    %262 = vmatpush.bf16.xpose.msra.mxu0 %v256
    %263 = vmatpush.bf16.xpose.msra.mxu0 %v253
    %264 = vmatpush.bf16.xpose.msra.mxu0 %v250
    %265 = vmatpush.bf16.xpose.msra.mxu0 %v247
    %266 = vmatpush.bf16.xpose.msra.mxu0 %v244
    %267 = vmatpush.bf16.xpose.msra.mxu0 %v241
    %268 = vmatpush.bf16.xpose.msra.mxu0 %v238
    %269 = vmatmul.bf16.gmra.mxu0 %v214
    %v270 = vpop.f32.mrf.mxu0
    %v271 = vadd.f32 %v95, %v270
    %v272 = vpop.f32.mrf.mxu0
    %v273 = vadd.f32 %v100, %v272
    %274 = vmatmul.bf16.gmra.mxu0 %v217
    %v275 = vpop.f32.mrf.mxu0
    %v276 = vadd.f32 %v105, %v275
    %v277 = vpop.f32.mrf.mxu0
    %v278 = vadd.f32 %v110, %v277
    %279 = vmatmul.bf16.gmra.mxu0 %v220
    %v280 = vpop.f32.mrf.mxu0
    %v281 = vadd.f32 %v115, %v280
    %v282 = vpop.f32.mrf.mxu0
    %v283 = vadd.f32 %v120, %v282
    %284 = vmatmul.bf16.gmra.mxu0 %v223
    %v285 = vpop.f32.mrf.mxu0
    %v286 = vadd.f32 %v125, %v285
    %v287 = vpop.f32.mrf.mxu0
    %v288 = vadd.f32 %v130, %v287
    %289 = vmatmul.bf16.gmra.mxu0 %v226
    %v290 = vpop.f32.mrf.mxu0
    %v291 = vadd.f32 %v135, %v290
    %v292 = vpop.f32.mrf.mxu0
    %v293 = vadd.f32 %v140, %v292
    %294 = vmatmul.bf16.gmra.mxu0 %v229
    %v295 = vpop.f32.mrf.mxu0
    %v296 = vadd.f32 %v145, %v295
    %v297 = vpop.f32.mrf.mxu0
    %v298 = vadd.f32 %v150, %v297
    %299 = vmatmul.bf16.gmra.mxu0 %v232
    %v300 = vpop.f32.mrf.mxu0
    %v301 = vadd.f32 %v155, %v300
    %v302 = vpop.f32.mrf.mxu0
    %v303 = vadd.f32 %v160, %v302
    %304 = vmatmul.bf16.gmra.mxu0 %v235
    %v305 = vpop.f32.mrf.mxu0
    %v306 = vadd.f32 %v165, %v305
    %v307 = vpop.f32.mrf.mxu0
    %v308 = vadd.f32 %v170, %v307
    %309 = vdwg.mxu0
    %v310 = vmul.f32 %v271, 0.2
    %v311 = vmul.f32 %v273, 0.2
    %v312 = vmul.f32 %v276, 0.2
    %v313 = vmul.f32 %v278, 0.2
    %v314 = vmul.f32 %v281, 0.2
    %v315 = vmul.f32 %v283, 0.2
    %v316 = vmul.f32 %v286, 0.2
    %v317 = vmul.f32 %v288, 0.2
    %v318 = vmul.f32 %v291, 0.2
    %v319 = vmul.f32 %v293, 0.2
    %v320 = vmul.f32 %v296, 0.2
    %v321 = vmul.f32 %v298, 0.2
    %v322 = vmul.f32 %v301, 0.2
    %v323 = vmul.f32 %v303, 0.2
    %v324 = vmul.f32 %v306, 0.2
    %v325 = vmul.f32 %v308, 0.2
    %v326 = vmax.f32 %v271, %v310
    %v327 = vmax.f32 %v273, %v311
    %v328 = vmax.f32 %v276, %v312
    %v329 = vmax.f32 %v278, %v313
    %v330 = vmax.f32 %v281, %v314
    %v331 = vmax.f32 %v283, %v315
    %v332 = vmax.f32 %v286, %v316
    %v333 = vmax.f32 %v288, %v317
    %v334 = vmax.f32 %v291, %v318
    %v335 = vmax.f32 %v293, %v319
    %v336 = vmax.f32 %v296, %v320
    %v337 = vmax.f32 %v298, %v321
    %v338 = vmax.f32 %v301, %v322
    %v339 = vmax.f32 %v303, %v323
    %v340 = vmax.f32 %v306, %v324
    %v341 = vmax.f32 %v308, %v325
    %v342 = vld [vmem:[%s3] sm:$0xf]
    %v343 = vld [vmem:[%s3 + $0x4] sm:$0xf]
    %v344 = vld [vmem:[%s3 + $0x8] sm:$0xf]
    %v345 = vld [vmem:[%s3 + $0xc] sm:$0xf]
    %v346 = vld [vmem:[%s3 + $0x10] sm:$0xf]
    %v347 = vld [vmem:[%s3 + $0x14] sm:$0xf]
    %v348 = vld [vmem:[%s3 + $0x18] sm:$0xf]
    %v349 = vld [vmem:[%s3 + $0x1c] sm:$0xf]
    %v350 = vpack.c.bf16 %v327, %v326
    %v351 = vpack.c.bf16 %v329, %v328
    %v352 = vpack.c.bf16 %v331, %v330
    %v353 = vpack.c.bf16 %v333, %v332
    %v354 = vpack.c.bf16 %v335, %v334
    %v355 = vpack.c.bf16 %v337, %v336
    %v356 = vpack.c.bf16 %v339, %v338
    %v357 = vpack.c.bf16 %v341, %v340
    %v358 = vld [vmem:[%s4] sm:$0xff]
    %v359 = vld [vmem:[%s4 + $0x8] sm:$0xff]
    %v360 = vld [vmem:[%s4 + $0x10] sm:$0xff]
    %v361 = vld [vmem:[%s4 + $0x18] sm:$0xff]
    %v362 = vld [vmem:[%s4 + $0x20] sm:$0xff]
    %v363 = vld [vmem:[%s4 + $0x28] sm:$0xff]
    %v364 = vld [vmem:[%s4 + $0x30] sm:$0xff]
    %v365 = vld [vmem:[%s4 + $0x38] sm:$0xff]
    %367 = vset.pattern.permute.xlu0 0
    %368 = vperm.xlu0 %367, %v358
    %v369 = vpop.permute.xlu0 %368
    %372 = vset.pattern.permute.xlu0 0
    %373 = vperm.xlu0 %372, %v359
    %v374 = vpop.permute.xlu0 %373
    %377 = vset.pattern.permute.xlu0 0
    %378 = vperm.xlu0 %377, %v360
    %v379 = vpop.permute.xlu0 %378
    %382 = vset.pattern.permute.xlu0 0
    %383 = vperm.xlu0 %382, %v361
    %v384 = vpop.permute.xlu0 %383
    %387 = vset.pattern.permute.xlu0 0
    %388 = vperm.xlu0 %387, %v362
    %v389 = vpop.permute.xlu0 %388
    %392 = vset.pattern.permute.xlu0 0
    %393 = vperm.xlu0 %392, %v363
    %v394 = vpop.permute.xlu0 %393
    %397 = vset.pattern.permute.xlu0 0
    %398 = vperm.xlu0 %397, %v364
    %v399 = vpop.permute.xlu0 %398
    %402 = vset.pattern.permute.xlu0 0
    %403 = vperm.xlu0 %402, %v365
    %v404 = vpop.permute.xlu0 %403
    %v414 = vunpack.c.l.b16 %v342
    %v415 = vunpack.c.l.b16 %v343
    %v416 = vunpack.c.l.b16 %v344
    %v417 = vunpack.c.l.b16 %v345
    %v418 = vunpack.c.l.b16 %v346
    %v419 = vunpack.c.l.b16 %v347
    %v420 = vunpack.c.l.b16 %v348
    %v421 = vunpack.c.l.b16 %v349
    %v422 = vpack.c.b16 %v415, %v414
    %v423 = vpack.c.b16 %v417, %v416
    %v424 = vpack.c.b16 %v419, %v418
    %v425 = vpack.c.b16 %v421, %v420
    %430 = vmatpush.bf16.msra.mxu0 %v357
    %431 = vmatpush.bf16.msra.mxu0 %v356
    %432 = vmatpush.bf16.msra.mxu0 %v355
    %433 = vmatpush.bf16.msra.mxu0 %v354
    %434 = vmatpush.bf16.msra.mxu0 %v353
    %435 = vmatpush.bf16.msra.mxu0 %v352
    %436 = vmatpush.bf16.msra.mxu0 %v351
    %437 = vmatpush.bf16.msra.mxu0 %v350
    %438 = vmatmul.bf16.gmra.mxu0 %v422
    %v439 = vpop.f32.mrf.mxu0
    %v440 = vadd.f32 %v369, %v439
    %v441 = vpop.f32.mrf.mxu0
    %v442 = vadd.f32 %v374, %v441
    %443 = vmatmul.bf16.gmra.mxu0 %v423
    %v444 = vpop.f32.mrf.mxu0
    %v445 = vadd.f32 %v379, %v444
    %v446 = vpop.f32.mrf.mxu0
    %v447 = vadd.f32 %v384, %v446
    %448 = vmatmul.bf16.gmra.mxu0 %v424
    %v449 = vpop.f32.mrf.mxu0
    %v450 = vadd.f32 %v389, %v449
    %v451 = vpop.f32.mrf.mxu0
    %v452 = vadd.f32 %v394, %v451
    %453 = vmatmul.bf16.gmra.mxu0 %v425
    %v454 = vpop.f32.mrf.mxu0
    %v455 = vadd.f32 %v399, %v454
    %v456 = vpop.f32.mrf.mxu0
    %v457 = vadd.f32 %v404, %v456
    %458 = vdwg.mxu0
    %v459 = vmul.f32 %v440, 0.2
    %v460 = vmul.f32 %v442, 0.2
    %v461 = vmul.f32 %v445, 0.2
    %v462 = vmul.f32 %v447, 0.2
    %v463 = vmul.f32 %v450, 0.2
    %v464 = vmul.f32 %v452, 0.2
    %v465 = vmul.f32 %v455, 0.2
    %v466 = vmul.f32 %v457, 0.2
    %v467 = vmax.f32 %v440, %v459
    %v468 = vmax.f32 %v442, %v460
    %v469 = vmax.f32 %v445, %v461
    %v470 = vmax.f32 %v447, %v462
    %v471 = vmax.f32 %v450, %v463
    %v472 = vmax.f32 %v452, %v464
    %v473 = vmax.f32 %v455, %v465
    %v474 = vmax.f32 %v457, %v466
    %v475 = vld [vmem:[%s5] sm:$0xf]
    %v476 = vld [vmem:[%s5 + $0x4] sm:$0xf]
    %v477 = vpack.c.bf16 %v468, %v467
    %v478 = vpack.c.bf16 %v470, %v469
    %v479 = vpack.c.bf16 %v472, %v471
    %v480 = vpack.c.bf16 %v474, %v473
    %v481 = vld [vmem:[%s6] sm:$0xff]
    %v482 = vld [vmem:[%s6 + $0x8] sm:$0xff]
    %484 = vset.pattern.permute.xlu0 0
    %485 = vperm.xlu0 %484, %v481
    %v486 = vpop.permute.xlu0 %485
    %489 = vset.pattern.permute.xlu0 0
    %490 = vperm.xlu0 %489, %v482
    %v491 = vpop.permute.xlu0 %490
    %v495 = vunpack.c.l.b16 %v475
    %v496 = vunpack.c.l.b16 %v476
    %v497 = vpack.c.b16 %v496, %v495
    %vm498 = vcmask 523264
    %v500 = vsel %vm498, %v497, 0
    %502 = vmatpush.bf16.msra.mxu0 0
    %503 = vmatpush.bf16.msra.mxu0 0
    %504 = vmatpush.bf16.msra.mxu0 0
    %505 = vmatpush.bf16.msra.mxu0 0
    %506 = vmatpush.bf16.msra.mxu0 %v480
    %507 = vmatpush.bf16.msra.mxu0 %v479
    %508 = vmatpush.bf16.msra.mxu0 %v478
    %509 = vmatpush.bf16.msra.mxu0 %v477
    %510 = vmatmul.bf16.gmra.mxu0 %v500
    %v511 = vpop.f32.mrf.mxu0
    %v512 = vadd.f32 %v486, %v511
    %v513 = vpop.f32.mrf.mxu0
    %v514 = vadd.f32 %v491, %v513
    %515 = vdwg.mxu0
    %v516 = vmul.f32 %v512, 0.2
    %v517 = vmul.f32 %v514, 0.2
    %v518 = vmax.f32 %v512, %v516
    %v519 = vmax.f32 %v514, %v517
    %v520 = vld [vmem:[%s7] sm:$0xff]
    %v521 = vld [vmem:[%s7 + $0x8] sm:$0xff]
    %523 = vset.pattern.permute.xlu0 0
    %524 = vperm.xlu0 %523, %v520
    %v525 = vpop.permute.xlu0 %524
    %528 = vset.pattern.permute.xlu0 0
    %529 = vperm.xlu0 %528, %v521
    %v530 = vpop.permute.xlu0 %529
    %v532 = vmul.f32 %v518, %v525
    %v533 = vmul.f32 %v519, %v530
    %v534 = vadd.f32 %v532, %v533
    %v535 = vrot.slane %v534, 4
    %v536 = vadd.f32 %v534, %v535
    %v537 = vrot.slane %v536, 2
    %v538 = vadd.f32 %v536, %v537
    %v539 = vrot.slane %v538, 1
    %v540 = vadd.f32 %v538, %v539
    %v541 = vld [vmem:[#allocation2] sm:$0x1]
    %543 = vset.pattern.permute.xlu0 0
    %544 = vperm.xlu0 %543, %v541
    %v545 = vpop.permute.xlu0 %544
    %v547 = vperm.slane %v545, 0
    %v548 = vadd.f32 %v540, %v547
    %v549 = vmax.f32 %v548, -30.0
    %v550 = vmin.f32 %v549, 30.0
    %v551 = vsub.f32 0.0, %v550
    %v552 = vmul.f32 %v551, 1.442695
    %v553 = vpow.pop %v552
    %v554 = vadd.f32 %v553, 1.0
    %v555 = vrcp.pop %v554
    %556 = vst [vmem:[#allocation3] sm:$0x1] %v555
    // Predicated region
    $region38: #{tpu_custom_call.1} parent=1 // pred_check
      _
    $region39: #{tpu_custom_call.1} parent=1 // pred_check_branch
      %558 = sbr.rel (0) target = $region41
    $region40: #{tpu_custom_call.1} parent=1 // pred_region
      %560 = vsyncadd [#allocation4], 0
      %s562 = sshll.u32 [#allocation3], 4
      %s563 = int_to_ptr.vmem [resolvable:$true] %s562
      %s564 = sshll.u32 %s9, 4
      %s565 = int_to_ptr.hbm [resolvable:$true] %s564
      %567 = dma.vmem_to_hbm [thread:$0]  %s563, 16, %s565, [#allocation4]
    $region41: #{tpu_custom_call.1} parent=1 // pred_fallthru
      _
    // Predicated region
    $region42: #{tpu_custom_call.1} parent=1 // pred_check
      _
    $region43: #{tpu_custom_call.1} parent=1 // pred_check_branch
      %569 = sbr.rel (0) target = $region45
    $region44: #{tpu_custom_call.1} parent=1 // pred_region
      %571 = dma.done [#allocation4], 16
    $region45: #{tpu_custom_call.1} parent=1 // pred_fallthru
      _
    %572 = vsyncpa [#allocation4], 1

</llo_original>
